<compile_context>
chip_gen: v6e
topology: v6e:2x2x1
jax: 0.10.0
libtpu: 0.0.40
codegen_flags: <defaults>
</compile_context>

<pallas_src>
import jax
import jax.numpy as jnp
from jax.experimental import pallas as pl
from jax.experimental.pallas import tpu as pltpu


def _discriminator_kernel(s_ref, a_ref, w1s_ref, w1a_ref, b1_ref,
                          w2_ref, b2_ref, w3_ref, b3_ref, out_ref):
    # Layer 1: fused "concat" matmul -> bias -> ReLU (f32 accumulation on MXU).
    h1 = jnp.dot(s_ref[...], w1s_ref[...], preferred_element_type=jnp.float32)
    h1 = h1 + jnp.dot(a_ref[...], w1a_ref[...], preferred_element_type=jnp.float32)
    h1 = jnp.maximum(h1 + b1_ref[...], 0.0)
    # Layer 2: matmul -> bias -> ReLU.
    h2 = jnp.dot(h1.astype(w2_ref.dtype), w2_ref[...],
                 preferred_element_type=jnp.float32)
    h2 = jnp.maximum(h2 + b2_ref[...], 0.0)
    # Layer 3 (N=1): VPU multiply + lane reduction; skip the 1-lane MXU matmul.
    logits = jnp.sum(h2 * w3_ref[...], axis=-1, keepdims=True) + b3_ref[0, 0]
    out_ref[...] = jax.nn.sigmoid(logits).astype(out_ref.dtype)
    # TODO(synk): lane-dense (1, TB) output packing (second-order win) not applied.


def _round_up(x, m):
    return (x + m - 1) // m * m


def discriminator_forward(states, actions, params, *,
                          compute_dtype=jnp.bfloat16, block_rows=512):
    """states: (B, S), actions: (B, A); params from init_params. Returns (B, 1) f32."""
    w1, b1, w2, b2, w3, b3 = params
    B, S = states.shape
    A = actions.shape[1]
    H1 = w1.shape[1]
    H2 = w2.shape[1]

    # Split W1 so the concat never materializes; W3 (64,1) becomes a (1,64) row.
    w1_s = w1[:S].astype(compute_dtype)
    w1_a = w1[S:].astype(compute_dtype)
    w2_c = w2.astype(compute_dtype)
    w3_row = w3.reshape(1, H2).astype(jnp.float32)
    b1 = b1.reshape(1, H1).astype(jnp.float32)
    b2 = b2.reshape(1, H2).astype(jnp.float32)
    b3 = b3.reshape(1, 1).astype(jnp.float32)

    states = states.astype(compute_dtype)
    actions = actions.astype(compute_dtype)

    # Batch tiling: TB rows per grid step (multiple of 8 sublanes), padded batch.
    tb = min(block_rows, _round_up(B, 8))
    b_pad = _round_up(B, tb)
    if b_pad != B:
        states = jnp.pad(states, ((0, b_pad - B), (0, 0)))
        actions = jnp.pad(actions, ((0, b_pad - B), (0, 0)))
    grid = (b_pad // tb,)

    act_spec = lambda f: pl.BlockSpec((tb, f), lambda i: (i, 0))
    const = lambda shape: pl.BlockSpec(shape, lambda i: (0, 0))   # VMEM-resident
    smem = pl.BlockSpec(memory_space=pltpu.MemorySpace.SMEM)      # scalar bias

    itemsize = jnp.dtype(compute_dtype).itemsize
    cost = pl.CostEstimate(
        flops=b_pad * (2 * (S + A) * H1 + 2 * H1 * H2 + 2 * H2),
        transcendentals=b_pad,  # one sigmoid per row
        bytes_accessed=(b_pad * (S + A) * itemsize                 # activations in
                        + ((S + A) * H1 + H1 * H2) * itemsize      # weights
                        + (H1 + 2 * H2 + 1 + b_pad) * 4),          # biases + out
    )

    out = pl.pallas_call(
        _discriminator_kernel,
        out_shape=jax.ShapeDtypeStruct((b_pad, 1), jnp.float32),
        grid=grid,
        in_specs=[
            act_spec(S),        # states tile   (pipelined over batch)
            act_spec(A),        # actions tile  (pipelined over batch)
            const((S, H1)),     # w1_s  (resident)
            const((A, H1)),     # w1_a  (resident)
            const((1, H1)),     # b1
            const((H1, H2)),    # w2
            const((1, H2)),     # b2
            const((1, H2)),     # w3 as a row
            smem,               # b3 scalar in SMEM
        ],
        out_specs=pl.BlockSpec((tb, 1), lambda i: (i, 0)),
        compiler_params=pltpu.CompilerParams(
            dimension_semantics=("parallel",)),
        cost_estimate=cost,
    )(states, actions, w1_s, w1_a, b1, w2_c, b2, w3_row, b3)

    return out[:B]


def init_params(key, num_states, num_actions, num_hiddens=(64, 64)):
    """Deterministic init matching nn.Linear default: U(-1/sqrt(fan_in), +)."""
    dims = [num_states + num_actions, *num_hiddens, 1]
    params = []
    for i in range(len(dims) - 1):
        fan_in, fan_out = dims[i], dims[i + 1]
        key, kw, kb = jax.random.split(key, 3)
        bound = 1.0 / (fan_in ** 0.5)
        w = jax.random.uniform(kw, (fan_in, fan_out), jnp.float32, -bound, bound)
        b = jax.random.uniform(kb, (1, fan_out), jnp.float32, -bound, bound)
        params += [w, b]
    return tuple(params)


def _reference(states, actions, params):
    """Pure-JAX f32 reference of the PyTorch forward."""
    w1, b1, w2, b2, w3, b3 = params
    x = jnp.concatenate([states, actions], axis=-1)
    x = jnp.maximum(x @ w1 + b1, 0.0)
    x = jnp.maximum(x @ w2 + b2, 0.0)
    return jax.nn.sigmoid(x @ w3 + b3)


if __name__ == "__main__":
    num_states, num_actions = 24, 8
    batch = 8

    key = jax.random.PRNGKey(0)
    k_s, k_a, k_p = jax.random.split(key, 3)
    states = jax.random.normal(k_s, (batch, num_states), jnp.float32)
    actions = jax.random.normal(k_a, (batch, num_actions), jnp.float32)
    params = init_params(k_p, num_states, num_actions)

    out = discriminator_forward(states, actions, params)
    out = jax.block_until_ready(out)

    ref = _reference(states, actions, params)
    assert out.shape == (batch, 1)
    assert bool(jnp.all(jnp.isfinite(out)))
    assert bool(jnp.all((out >= 0.0) & (out <= 1.0)))
    # bf16 matmul operands with f32 accumulation: loose tolerance vs f32 reference.
    assert bool(jnp.allclose(out, ref, atol=5e-2)), float(jnp.max(jnp.abs(out - ref)))
    print("KERNEL_OK")
</pallas_src>

<mosaic_0001>
module attributes {stable_mosaic.version = 11 : i64} {
  func.func @_discriminator_kernel(%arg0: i32, %arg1: memref<8x24xbf16, #tpu.memory_space<vmem>>, %arg2: memref<8x8xbf16, #tpu.memory_space<vmem>>, %arg3: memref<24x64xbf16, #tpu.memory_space<vmem>>, %arg4: memref<8x64xbf16, #tpu.memory_space<vmem>>, %arg5: memref<1x64xf32, #tpu.memory_space<vmem>>, %arg6: memref<64x64xbf16, #tpu.memory_space<vmem>>, %arg7: memref<1x64xf32, #tpu.memory_space<vmem>>, %arg8: memref<1x64xf32, #tpu.memory_space<vmem>>, %arg9: memref<1x1xf32, #tpu.memory_space<smem>>, %arg10: memref<8x1xf32, #tpu.memory_space<vmem>>) attributes {dimension_semantics = [#tpu.dimension_semantics<parallel>], iteration_bounds = array<i64: 1>, scalar_prefetch = 0 : i64, scratch_operands = 0 : i64, tpu.core_type = #tpu.core_type<tc>, window_params = [{transform_indices = @transform_0, window_bounds = array<i64: 8, 24>}, {transform_indices = @transform_1, window_bounds = array<i64: 8, 8>}, {pipeline_mode = #tpu.pipeline_mode<synchronous>, transform_indices = @transform_2, window_bounds = array<i64: 24, 64>}, {pipeline_mode = #tpu.pipeline_mode<synchronous>, transform_indices = @transform_3, window_bounds = array<i64: 8, 64>}, {pipeline_mode = #tpu.pipeline_mode<synchronous>, transform_indices = @transform_4, window_bounds = array<i64: 1, 64>}, {pipeline_mode = #tpu.pipeline_mode<synchronous>, transform_indices = @transform_5, window_bounds = array<i64: 64, 64>}, {pipeline_mode = #tpu.pipeline_mode<synchronous>, transform_indices = @transform_6, window_bounds = array<i64: 1, 64>}, {pipeline_mode = #tpu.pipeline_mode<synchronous>, transform_indices = @transform_7, window_bounds = array<i64: 1, 64>}, {transform_indices = @transform_8, window_bounds = array<i64: 1, 1>}, {transform_indices = @transform_9, window_bounds = array<i64: 8, 1>}]} {
    %c0 = arith.constant 0 : index
    %c0_0 = arith.constant 0 : index
    %0 = vector.load %arg1[%c0, %c0_0] : memref<8x24xbf16, #tpu.memory_space<vmem>>, vector<8x24xbf16>
    %c0_1 = arith.constant 0 : index
    %c0_2 = arith.constant 0 : index
    %1 = vector.load %arg3[%c0_1, %c0_2] : memref<24x64xbf16, #tpu.memory_space<vmem>>, vector<24x64xbf16>
    %cst = arith.constant dense<0.000000e+00> : vector<8x64xf32>
    %2 = tpu.matmul %0, %1, %cst {dimension_numbers = #tpu.dot_dimension_numbers<[1], [0], [0], [1], [0, 0, 1, 1], [], []>} : vector<8x24xbf16>, vector<24x64xbf16>, vector<8x64xf32> -> vector<8x64xf32>
    %c0_3 = arith.constant 0 : index
    %c0_4 = arith.constant 0 : index
    %3 = vector.load %arg2[%c0_3, %c0_4] : memref<8x8xbf16, #tpu.memory_space<vmem>>, vector<8x8xbf16>
    %c0_5 = arith.constant 0 : index
    %c0_6 = arith.constant 0 : index
    %4 = vector.load %arg4[%c0_5, %c0_6] : memref<8x64xbf16, #tpu.memory_space<vmem>>, vector<8x64xbf16>
    %cst_7 = arith.constant dense<0.000000e+00> : vector<8x64xf32>
    %5 = tpu.matmul %3, %4, %cst_7 {dimension_numbers = #tpu.dot_dimension_numbers<[1], [0], [0], [1], [0, 0, 1, 1], [], []>} : vector<8x8xbf16>, vector<8x64xbf16>, vector<8x64xf32> -> vector<8x64xf32>
    %6 = arith.addf %2, %5 : vector<8x64xf32>
    %c0_8 = arith.constant 0 : index
    %c0_9 = arith.constant 0 : index
    %7 = vector.load %arg5[%c0_8, %c0_9] : memref<1x64xf32, #tpu.memory_space<vmem>>, vector<1x64xf32>
    %8 = vector.broadcast %7 : vector<1x64xf32> to vector<8x64xf32>
    %9 = arith.addf %6, %8 : vector<8x64xf32>
    %cst_10 = arith.constant 0.000000e+00 : f32
    %10 = vector.broadcast %cst_10 : f32 to vector<8x64xf32>
    %11 = arith.maximumf %9, %10 : vector<8x64xf32>
    %12 = arith.truncf %11 : vector<8x64xf32> to vector<8x64xbf16>
    %c0_11 = arith.constant 0 : index
    %c0_12 = arith.constant 0 : index
    %13 = vector.load %arg6[%c0_11, %c0_12] : memref<64x64xbf16, #tpu.memory_space<vmem>>, vector<64x64xbf16>
    %cst_13 = arith.constant dense<0.000000e+00> : vector<8x64xf32>
    %14 = tpu.matmul %12, %13, %cst_13 {dimension_numbers = #tpu.dot_dimension_numbers<[1], [0], [0], [1], [0, 0, 1, 1], [], []>} : vector<8x64xbf16>, vector<64x64xbf16>, vector<8x64xf32> -> vector<8x64xf32>
    %c0_14 = arith.constant 0 : index
    %c0_15 = arith.constant 0 : index
    %15 = vector.load %arg7[%c0_14, %c0_15] : memref<1x64xf32, #tpu.memory_space<vmem>>, vector<1x64xf32>
    %16 = vector.broadcast %15 : vector<1x64xf32> to vector<8x64xf32>
    %17 = arith.addf %14, %16 : vector<8x64xf32>
    %cst_16 = arith.constant 0.000000e+00 : f32
    %18 = vector.broadcast %cst_16 : f32 to vector<8x64xf32>
    %19 = arith.maximumf %17, %18 : vector<8x64xf32>
    %c0_17 = arith.constant 0 : index
    %c0_18 = arith.constant 0 : index
    %20 = vector.load %arg8[%c0_17, %c0_18] : memref<1x64xf32, #tpu.memory_space<vmem>>, vector<1x64xf32>
    %21 = vector.broadcast %20 : vector<1x64xf32> to vector<8x64xf32>
    %22 = arith.mulf %19, %21 : vector<8x64xf32>
    %cst_19 = arith.constant dense<0.000000e+00> : vector<8xf32>
    %23 = vector.multi_reduction <add>, %22, %cst_19 [1] : vector<8x64xf32> to vector<8xf32>
    %24 = vector.shape_cast %23 : vector<8xf32> to vector<8x1xf32>
    %c0_20 = arith.constant 0 : index
    %c0_21 = arith.constant 0 : index
    %25 = memref.load %arg9[%c0_20, %c0_21] : memref<1x1xf32, #tpu.memory_space<smem>>
    %26 = vector.broadcast %25 : f32 to vector<8x1xf32>
    %27 = arith.addf %24, %26 : vector<8x1xf32>
    %28 = arith.negf %27 : vector<8x1xf32>
    %29 = math.exp %28 : vector<8x1xf32>
    %cst_22 = arith.constant 1.000000e+00 : f32
    %30 = vector.broadcast %cst_22 : f32 to vector<8x1xf32>
    %31 = arith.addf %30, %29 : vector<8x1xf32>
    %32 = arith.divf %30, %31 : vector<8x1xf32>
    %c0_23 = arith.constant 0 : index
    %c0_24 = arith.constant 0 : index
    %33 = vector.load %arg10[%c0_23, %c0_24] : memref<8x1xf32, #tpu.memory_space<vmem>>, vector<8x1xf32>
    tpu.vector_store %arg10[%c0_23, %c0_24], %32 {strides = array<i32>} : memref<8x1xf32, #tpu.memory_space<vmem>>, vector<8x1xf32>,
    return
  }
  func.func @transform_0(%arg0: i32) -> (i32, i32) {
    %c0_i32 = arith.constant 0 : i32
    %c0_i32_0 = arith.constant 0 : i32
    return %arg0, %c0_i32 : i32, i32
  }
  func.func @transform_1(%arg0: i32) -> (i32, i32) {
    %c0_i32 = arith.constant 0 : i32
    %c0_i32_0 = arith.constant 0 : i32
    return %arg0, %c0_i32 : i32, i32
  }
  func.func @transform_2(%arg0: i32) -> (i32, i32) {
    %c0_i32 = arith.constant 0 : i32
    %c0_i32_0 = arith.constant 0 : i32
    %c0_i32_1 = arith.constant 0 : i32
    return %c0_i32, %c0_i32_0 : i32, i32
  }
  func.func @transform_3(%arg0: i32) -> (i32, i32) {
    %c0_i32 = arith.constant 0 : i32
    %c0_i32_0 = arith.constant 0 : i32
    %c0_i32_1 = arith.constant 0 : i32
    return %c0_i32, %c0_i32_0 : i32, i32
  }
  func.func @transform_4(%arg0: i32) -> (i32, i32) {
    %c0_i32 = arith.constant 0 : i32
    %c0_i32_0 = arith.constant 0 : i32
    %c0_i32_1 = arith.constant 0 : i32
    return %c0_i32, %c0_i32_0 : i32, i32
  }
  func.func @transform_5(%arg0: i32) -> (i32, i32) {
    %c0_i32 = arith.constant 0 : i32
    %c0_i32_0 = arith.constant 0 : i32
    %c0_i32_1 = arith.constant 0 : i32
    return %c0_i32, %c0_i32_0 : i32, i32
  }
  func.func @transform_6(%arg0: i32) -> (i32, i32) {
    %c0_i32 = arith.constant 0 : i32
    %c0_i32_0 = arith.constant 0 : i32
    %c0_i32_1 = arith.constant 0 : i32
    return %c0_i32, %c0_i32_0 : i32, i32
  }
  func.func @transform_7(%arg0: i32) -> (i32, i32) {
    %c0_i32 = arith.constant 0 : i32
    %c0_i32_0 = arith.constant 0 : i32
    %c0_i32_1 = arith.constant 0 : i32
    return %c0_i32, %c0_i32_0 : i32, i32
  }
  func.func @transform_8(%arg0: i32) -> (i32, i32) {
    %c0_i32 = arith.constant 0 : i32
    %c0_i32_0 = arith.constant 0 : i32
    %c0_i32_1 = arith.constant 0 : i32
    return %c0_i32, %c0_i32_0 : i32, i32
  }
  func.func @transform_9(%arg0: i32) -> (i32, i32) {
    %c0_i32 = arith.constant 0 : i32
    %c0_i32_0 = arith.constant 0 : i32
    return %arg0, %c0_i32 : i32, i32
  }
}

</mosaic_0001>

<llo_original>
// kernel: tpu_custom_call.1
$region0: #{tpu_custom_call.1}
  #allocation0 [shape = 'u32[]', space=smem, size = 0x4, offset = 0x4, fixed_abs, tag = 'smem constant byte address 0x4 - core index']
  #allocation1 [shape = 'u32[144,128]{1,0:T(1,128)}', space=vmem, size = 0x12000, scoped, tag = 'internal scratch']
  #allocation2 [shape = 'f32[1,1]{1,0:T(1,128)S(6)}', space=smem, size = 0x200, scoped, tag = 'scoped memory for tpu_custom_call.1']
  %s0 = inlined_call_operand.hbm [shape: bf16[8,24], index: 0, kind: input, shape index: {}]
  %s1 = inlined_call_operand.hbm [shape: bf16[8,8], index: 1, kind: input, shape index: {}]
  %s2 = inlined_call_operand.hbm [shape: bf16[24,64], index: 2, kind: input, shape index: {}]
  %s3 = inlined_call_operand.vmem [shape: bf16[8,64], index: 3, kind: input, shape index: {}]
  %s4 = inlined_call_operand.vmem [shape: f32[1,64], index: 4, kind: input, shape index: {}]
  %s5 = inlined_call_operand.hbm [shape: bf16[64,64], index: 5, kind: input, shape index: {}]
  %s6 = inlined_call_operand.vmem [shape: f32[1,64], index: 6, kind: input, shape index: {}]
  %s7 = inlined_call_operand.vmem [shape: f32[1,64], index: 7, kind: input, shape index: {}]
  %s8 = inlined_call_operand.<no memory space> [shape: f32[1,1], index: 8, kind: input, shape index: {}]
  %s9 = inlined_call_operand.vmem [shape: f32[8,1], index: 9, kind: output, shape index: {}]
  %s10 = sld [smem:[#allocation0]]
  $region62: #{tpu_custom_call.1} parent=0
    _
  %s12 = ssub.s32 1, %s10
  %s13 = scalar_select 0, %s12, %s10
  %14 = sst [smem:[#allocation2]] %s8
  $region1: #{tpu_custom_call.1} parent=0
    #allocation3 [shape = 'u8[2048]{0}', space=vmem, size = 0x800, scoped, tag = 'input window, operand 0, single buffered']
    #allocation4 [shape = 's32[1]{0}', space=sflag, size = 0x4, scoped, tag = 'scoped memory for tpu_custom_call.1']
    #allocation5 [shape = 'u8[2048]{0}', space=vmem, size = 0x800, scoped, tag = 'input window, operand 1, single buffered']
    #allocation6 [shape = 's32[1]{0}', space=sflag, size = 0x4, scoped, tag = 'scoped memory for tpu_custom_call.1']
    #allocation7 [shape = 'u8[6144]{0}', space=vmem, size = 0x1800, scoped, tag = 'input window, operand 2, single buffered']
    #allocation8 [shape = 'u8[16384]{0}', space=vmem, size = 0x4000, scoped, tag = 'input window, operand 5, single buffered']
    #allocation9 [shape = 's32[1]{0}', space=sflag, size = 0x4, scoped, tag = 'scoped memory for tpu_custom_call.1']
    %15 = vsyncpa [#allocation4], 0
    %16 = vsyncpa [#allocation6], 0
    %17 = vsyncpa [#allocation9], 0
    // Predicated region
    $region2: #{tpu_custom_call.1} parent=1 // pred_check
      _
    $region3: #{tpu_custom_call.1} parent=1 // pred_check_branch
      %19 = sbr.rel (0) target = $region5
    $region4: #{tpu_custom_call.1} parent=1 // pred_region
      %s21 = ssub.s32 64, 64
      %22 = vsyncadd [#allocation4], %s21
      %s24 = sshll.u32 [#allocation3], 4
      %s25 = int_to_ptr.vmem [resolvable:$true] %s24
      %27 = dma.hbm_to_vmem [thread:$0]  %s0, 64, %s25, [#allocation4]
    $region5: #{tpu_custom_call.1} parent=1 // pred_fallthru
      _
    // Predicated region
    $region6: #{tpu_custom_call.1} parent=1 // pred_check
      _
    $region7: #{tpu_custom_call.1} parent=1 // pred_check_branch
      %29 = sbr.rel (0) target = $region9
    $region8: #{tpu_custom_call.1} parent=1 // pred_region
      %s31 = ssub.s32 64, 64
      %32 = vsyncadd [#allocation6], %s31
      %s34 = sshll.u32 [#allocation5], 4
      %s35 = int_to_ptr.vmem [resolvable:$true] %s34
      %37 = dma.hbm_to_vmem [thread:$0]  %s1, 64, %s35, [#allocation6]
    $region9: #{tpu_custom_call.1} parent=1 // pred_fallthru
      _
    // Predicated region
    $region10: #{tpu_custom_call.1} parent=1 // pred_check
      _
    $region11: #{tpu_custom_call.1} parent=1 // pred_check_branch
      %39 = sbr.rel (0) target = $region13
    $region12: #{tpu_custom_call.1} parent=1 // pred_region
      %s41 = ssub.s32 192, 192
      %42 = vsyncadd [#allocation6], %s41
      %s43 = sshll.u32 [#allocation7], 4
      %s44 = int_to_ptr.vmem [resolvable:$true] %s43
      %49 = dma.hbm_to_vmem [thread:$0]  %s2, 192, %s44, [#allocation6], 64, 64, 4
    $region13: #{tpu_custom_call.1} parent=1 // pred_fallthru
      _
    // Predicated region
    $region14: #{tpu_custom_call.1} parent=1 // pred_check
      _
    $region15: #{tpu_custom_call.1} parent=1 // pred_check_branch
      %51 = sbr.rel (0) target = $region17
    $region16: #{tpu_custom_call.1} parent=1 // pred_region
      _
    $region17: #{tpu_custom_call.1} parent=1 // pred_fallthru
      _
    // Predicated region
    $region18: #{tpu_custom_call.1} parent=1 // pred_check
      _
    $region19: #{tpu_custom_call.1} parent=1 // pred_check_branch
      %53 = sbr.rel (0) target = $region21
    $region20: #{tpu_custom_call.1} parent=1 // pred_region
      _
    $region21: #{tpu_custom_call.1} parent=1 // pred_fallthru
      _
    // Predicated region
    $region22: #{tpu_custom_call.1} parent=1 // pred_check
      _
    $region23: #{tpu_custom_call.1} parent=1 // pred_check_branch
      %55 = sbr.rel (0) target = $region25
    $region24: #{tpu_custom_call.1} parent=1 // pred_region
      %s57 = ssub.s32 512, 512
      %58 = vsyncadd [#allocation9], %s57
      %s59 = sshll.u32 [#allocation8], 4
      %s60 = int_to_ptr.vmem [resolvable:$true] %s59
      %65 = dma.hbm_to_vmem [thread:$0]  %s5, 512, %s60, [#allocation9], 64, 64, 4
    $region25: #{tpu_custom_call.1} parent=1 // pred_fallthru
      _
    // Predicated region
    $region26: #{tpu_custom_call.1} parent=1 // pred_check
      _
    $region27: #{tpu_custom_call.1} parent=1 // pred_check_branch
      %67 = sbr.rel (0) target = $region29
    $region28: #{tpu_custom_call.1} parent=1 // pred_region
      _
    $region29: #{tpu_custom_call.1} parent=1 // pred_fallthru
      _
    // Predicated region
    $region30: #{tpu_custom_call.1} parent=1 // pred_check
      _
    $region31: #{tpu_custom_call.1} parent=1 // pred_check_branch
      %69 = sbr.rel (0) target = $region33
    $region32: #{tpu_custom_call.1} parent=1 // pred_region
      _
    $region33: #{tpu_custom_call.1} parent=1 // pred_fallthru
      _
    // Predicated region
    $region34: #{tpu_custom_call.1} parent=1 // pred_check
      _
    $region35: #{tpu_custom_call.1} parent=1 // pred_check_branch
      %71 = sbr.rel (0) target = $region37
    $region36: #{tpu_custom_call.1} parent=1 // pred_region
      _
    $region37: #{tpu_custom_call.1} parent=1 // pred_fallthru
      _
    // Predicated region
    $region38: #{tpu_custom_call.1} parent=1 // pred_check
      _
    $region39: #{tpu_custom_call.1} parent=1 // pred_check_branch
      %73 = sbr.rel (0) target = $region41
    $region40: #{tpu_custom_call.1} parent=1 // pred_region
      %74 = dma.done [#allocation4], 64
    $region41: #{tpu_custom_call.1} parent=1 // pred_fallthru
      _
    // Predicated region
    $region42: #{tpu_custom_call.1} parent=1 // pred_check
      _
    $region43: #{tpu_custom_call.1} parent=1 // pred_check_branch
      %76 = sbr.rel (0) target = $region45
    $region44: #{tpu_custom_call.1} parent=1 // pred_region
      %77 = dma.done [#allocation6], 64
    $region45: #{tpu_custom_call.1} parent=1 // pred_fallthru
      _
    // Predicated region
    $region46: #{tpu_custom_call.1} parent=1 // pred_check
      _
    $region47: #{tpu_custom_call.1} parent=1 // pred_check_branch
      %79 = sbr.rel (0) target = $region49
    $region48: #{tpu_custom_call.1} parent=1 // pred_region
      %80 = dma.done [#allocation6], 192
    $region49: #{tpu_custom_call.1} parent=1 // pred_fallthru
      _
    // Predicated region
    $region50: #{tpu_custom_call.1} parent=1 // pred_check
      _
    $region51: #{tpu_custom_call.1} parent=1 // pred_check_branch
      %82 = sbr.rel (0) target = $region53
    $region52: #{tpu_custom_call.1} parent=1 // pred_region
      %83 = dma.done [#allocation9], 512
    $region53: #{tpu_custom_call.1} parent=1 // pred_fallthru
      _
    %v85 = vld [vmem:[#allocation3] sm:$0xf]
    %v86 = vld [vmem:[#allocation7] sm:$0xf]
    %v87 = vld [vmem:[#allocation7 + $0x4] sm:$0xf]
    %v88 = vld [vmem:[#allocation7 + $0x8] sm:$0xf]
    %v89 = vld [vmem:[#allocation5] sm:$0xf]
    %v90 = vld [vmem:[%s3] sm:$0xf]
    %vm91 = vcmask 64512
    %v93 = vsel %vm91, %v89, 0
    %vm95 = vcmask 1043456
    %v97 = vsel %vm95, %v90, 0
    %99 = vmatprep.subr.bf16.mxu0 0
    %100 = vmatpush1.bf16.msra.mxu0 0
    %101 = vmatprep.subr.bf16.mxu0 0
    %102 = vmatpush1.bf16.msra.mxu0 0
    %103 = vmatprep.subr.bf16.mxu0 0
    %104 = vmatpush1.bf16.msra.mxu0 0
    %105 = vmatprep.subr.bf16.mxu0 0
    %106 = vmatpush1.bf16.msra.mxu0 0
    %107 = vmatprep.subr.bf16.mxu0 0
    %108 = vmatpush1.bf16.msra.mxu0 0
    %109 = vmatprep.subr.bf16.mxu0 0
    %110 = vmatpush1.bf16.msra.mxu0 0
    %111 = vmatprep.subr.bf16.mxu0 0
    %112 = vmatpush1.bf16.msra.mxu0 0
    %113 = vmatprep.subr.bf16.mxu0 0
    %114 = vmatpush1.bf16.msra.mxu0 %v97
    %115 = vmatprep.subr.bf16.mxu0 0
    %116 = vmatpush2.bf16.msra.mxu0 0
    %117 = vmatprep.subr.bf16.mxu0 0
    %118 = vmatpush2.bf16.msra.mxu0 0
    %119 = vmatprep.subr.bf16.mxu0 0
    %120 = vmatpush2.bf16.msra.mxu0 0
    %121 = vmatprep.subr.bf16.mxu0 0
    %122 = vmatpush2.bf16.msra.mxu0 0
    %123 = vmatprep.subr.bf16.mxu0 0
    %124 = vmatpush2.bf16.msra.mxu0 0
    %125 = vmatprep.subr.bf16.mxu0 0
    %126 = vmatpush2.bf16.msra.mxu0 0
    %127 = vmatprep.subr.bf16.mxu0 0
    %128 = vmatpush2.bf16.msra.mxu0 0
    %129 = vmatprep.subr.bf16.mxu0 0
    %130 = vmatpush2.bf16.msra.mxu0 0
    %131 = vmatprep.mubr.bf16.mxu0 0
    %132 = vmatmul.mubr.bf16.gmra.mxu0 %v93
    %v133 = vpop.f32.mrf.mxu0
    %v134 = vadd.f32 0.0, %v133
    %v135 = vpop.f32.mrf.mxu0
    %v136 = vpop.f32.mrf.mxu0
    %v137 = vpop.f32.mrf.mxu0
    %138 = vdwg.mxu0
    %v142 = vunpack.c.l.b16 %v86
    %v143 = vunpack.c.l.b16 %v87
    %v144 = vunpack.c.l.b16 %v88
    %v145 = vpack.c.b16 %v143, %v142
    %v146 = vpack.c.b16 %v144, %v144
    %vm148 = vcmask 195584
    %v150 = vsel %vm148, %v85, 0
    %v153 = vsel %vm95, %v146, 0
    %155 = vmatprep.subr.bf16.mxu0 0
    %156 = vmatpush1.bf16.msra.mxu0 0
    %157 = vmatprep.subr.bf16.mxu0 0
    %158 = vmatpush1.bf16.msra.mxu0 0
    %159 = vmatprep.subr.bf16.mxu0 0
    %160 = vmatpush1.bf16.msra.mxu0 0
    %161 = vmatprep.subr.bf16.mxu0 0
    %162 = vmatpush1.bf16.msra.mxu0 0
    %163 = vmatprep.subr.bf16.mxu0 0
    %164 = vmatpush1.bf16.msra.mxu0 0
    %165 = vmatprep.subr.bf16.mxu0 0
    %166 = vmatpush1.bf16.msra.mxu0 0
    %167 = vmatprep.subr.bf16.mxu0 0
    %168 = vmatpush1.bf16.msra.mxu0 %v153
    %169 = vmatprep.subr.bf16.mxu0 0
    %170 = vmatpush1.bf16.msra.mxu0 %v145
    %171 = vmatprep.subr.bf16.mxu0 0
    %172 = vmatpush2.bf16.msra.mxu0 0
    %173 = vmatprep.subr.bf16.mxu0 0
    %174 = vmatpush2.bf16.msra.mxu0 0
    %175 = vmatprep.subr.bf16.mxu0 0
    %176 = vmatpush2.bf16.msra.mxu0 0
    %177 = vmatprep.subr.bf16.mxu0 0
    %178 = vmatpush2.bf16.msra.mxu0 0
    %179 = vmatprep.subr.bf16.mxu0 0
    %180 = vmatpush2.bf16.msra.mxu0 0
    %181 = vmatprep.subr.bf16.mxu0 0
    %182 = vmatpush2.bf16.msra.mxu0 0
    %183 = vmatprep.subr.bf16.mxu0 0
    %184 = vmatpush2.bf16.msra.mxu0 0
    %185 = vmatprep.subr.bf16.mxu0 0
    %186 = vmatpush2.bf16.msra.mxu0 0
    %187 = vmatprep.mubr.bf16.mxu0 0
    %188 = vmatmul.mubr.bf16.gmra.mxu0 %v150
    %v189 = vpop.f32.mrf.mxu0
    %v190 = vadd.f32 %v134, %v189
    %v191 = vpop.f32.mrf.mxu0
    %v192 = vpop.f32.mrf.mxu0
    %v193 = vpop.f32.mrf.mxu0
    %194 = vdwg.mxu0
    %v195 = vld [vmem:[%s4] sm:$0x1]
    %v197 = vlaneseq
    %v198 = vshrl.u32 %v197, 7
    %v199 = vsub.s32 0, %v198
    %v200 = vrot.slane %v195, %v199
    %v202 = vadd.f32 %v190, %v200
    %v203 = vmax.f32 %v202, 0.0
    %v204 = vpack.c.bf16 %v203, %v203
    %v205 = vld [vmem:[#allocation8] sm:$0xf]
    %v206 = vld [vmem:[#allocation8 + $0x4] sm:$0xf]
    %v207 = vld [vmem:[#allocation8 + $0x8] sm:$0xf]
    %v208 = vld [vmem:[#allocation8 + $0xc] sm:$0xf]
    %v209 = vld [vmem:[#allocation8 + $0x10] sm:$0xf]
    %v210 = vld [vmem:[#allocation8 + $0x14] sm:$0xf]
    %v211 = vld [vmem:[#allocation8 + $0x18] sm:$0xf]
    %v212 = vld [vmem:[#allocation8 + $0x1c] sm:$0xf]
    %v213 = vld [vmem:[%s6] sm:$0x1]
    %v215 = vlaneseq
    %v216 = vshrl.u32 %v215, 7
    %v217 = vsub.s32 0, %v216
    %v218 = vrot.slane %v213, %v217
    %v228 = vunpack.c.l.b16 %v205
    %v229 = vunpack.c.l.b16 %v206
    %v230 = vunpack.c.l.b16 %v207
    %v231 = vunpack.c.l.b16 %v208
    %v232 = vunpack.c.l.b16 %v209
    %v233 = vunpack.c.l.b16 %v210
    %v234 = vunpack.c.l.b16 %v211
    %v235 = vunpack.c.l.b16 %v212
    %v236 = vpack.c.b16 %v229, %v228
    %v237 = vpack.c.b16 %v231, %v230
    %v238 = vpack.c.b16 %v233, %v232
    %v239 = vpack.c.b16 %v235, %v234
    %vm244 = vcmask 523264
    %v246 = vsel %vm244, %v204, 0
    %248 = vmatprep.subr.bf16.mxu0 0
    %249 = vmatpush1.bf16.msra.mxu0 0
    %250 = vmatprep.subr.bf16.mxu0 0
    %251 = vmatpush1.bf16.msra.mxu0 0
    %252 = vmatprep.subr.bf16.mxu0 0
    %253 = vmatpush1.bf16.msra.mxu0 0
    %254 = vmatprep.subr.bf16.mxu0 0
    %255 = vmatpush1.bf16.msra.mxu0 0
    %256 = vmatprep.subr.bf16.mxu0 0
    %257 = vmatpush1.bf16.msra.mxu0 %v239
    %258 = vmatprep.subr.bf16.mxu0 0
    %259 = vmatpush1.bf16.msra.mxu0 %v238
    %260 = vmatprep.subr.bf16.mxu0 0
    %261 = vmatpush1.bf16.msra.mxu0 %v237
    %262 = vmatprep.subr.bf16.mxu0 0
    %263 = vmatpush1.bf16.msra.mxu0 %v236
    %264 = vmatprep.subr.bf16.mxu0 0
    %265 = vmatpush2.bf16.msra.mxu0 0
    %266 = vmatprep.subr.bf16.mxu0 0
    %267 = vmatpush2.bf16.msra.mxu0 0
    %268 = vmatprep.subr.bf16.mxu0 0
    %269 = vmatpush2.bf16.msra.mxu0 0
    %270 = vmatprep.subr.bf16.mxu0 0
    %271 = vmatpush2.bf16.msra.mxu0 0
    %272 = vmatprep.subr.bf16.mxu0 0
    %273 = vmatpush2.bf16.msra.mxu0 0
    %274 = vmatprep.subr.bf16.mxu0 0
    %275 = vmatpush2.bf16.msra.mxu0 0
    %276 = vmatprep.subr.bf16.mxu0 0
    %277 = vmatpush2.bf16.msra.mxu0 0
    %278 = vmatprep.subr.bf16.mxu0 0
    %279 = vmatpush2.bf16.msra.mxu0 0
    %280 = vmatprep.mubr.bf16.mxu0 0
    %281 = vmatmul.mubr.bf16.gmra.mxu0 %v246
    %v282 = vpop.f32.mrf.mxu0
    %v283 = vadd.f32 %v218, %v282
    %v284 = vpop.f32.mrf.mxu0
    %v285 = vpop.f32.mrf.mxu0
    %v286 = vpop.f32.mrf.mxu0
    %287 = vdwg.mxu0
    %v288 = vmax.f32 %v283, 0.0
    %v289 = vld [vmem:[%s7] sm:$0x1]
    %v291 = vlaneseq
    %v292 = vshrl.u32 %v291, 7
    %v293 = vsub.s32 0, %v292
    %v294 = vrot.slane %v289, %v293
    %v296 = vmul.f32 %v288, %v294
    %v297 = vsel %vm244, %v296, 0.0
    %298 = vadd.xlane.f32.xlu0 %v297
    %v299 = vpop.xlane.xlu0 %298
    %s300 = sld [smem:[#allocation2]]
    %v301 = vstv %s300
    %v302 = vadd.f32 %v299, %v301
    %v303 = vxor.u32 %v302, 2147483648
    %v304 = vmul.f32 %v303, 1.442695
    %v305 = vpow.pop %v304
    %v306 = vadd.f32 %v305, 1.0
    %v307 = vrcp.pop %v306
    %v308 = vmul.f32 1.0, %v307
    %vm309 = vcmask 7168
    %310 = vst.msk [vmem:[%s9] sm:$0xff] %vm309, %v308
    // Predicated region
    $region54: #{tpu_custom_call.1} parent=1 // pred_check
      _
    $region55: #{tpu_custom_call.1} parent=1 // pred_check_branch
      %312 = sbr.rel (0) target = $region57
    $region56: #{tpu_custom_call.1} parent=1 // pred_region
      _
    $region57: #{tpu_custom_call.1} parent=1 // pred_fallthru
      _
    // Predicated region
    $region58: #{tpu_custom_call.1} parent=1 // pred_check
      _
    $region59: #{tpu_custom_call.1} parent=1 // pred_check_branch
      %314 = sbr.rel (0) target = $region61
    $region60: #{tpu_custom_call.1} parent=1 // pred_region
      _
    $region61: #{tpu_custom_call.1} parent=1 // pred_fallthru
      _
    %315 = vsyncpa [#allocation4], 1
    %316 = vsyncpa [#allocation6], 1
    %317 = vsyncpa [#allocation9], 1

</llo_original>
